<compile_context>
chip_gen: v7x
topology: tpu7x:2x2x1
jax: 0.10.0
libtpu: 0.0.40
codegen_flags: <defaults>
</compile_context>

<pallas_src>
import functools

import jax
import jax.numpy as jnp
from jax.experimental import pallas as pl
from jax.experimental.pallas import tpu as pltpu

_EPS = 1e-6          # PyTorch nn.PairwiseDistance default eps
_LANE = 128
_MIB = 1024 * 1024


def _round_up(x, m):
    return ((x + m - 1) // m) * m


def _round_down(x, m):
    return (x // m) * m


def _vmem_budget():
    """(double-buffered input budget, vmem_limit_bytes), generation-aware."""
    try:
        vmem = int(pltpu.get_tpu_info().vmem_capacity_bytes)
    except Exception:
        vmem = 64 * _MIB                       # unknown chip: assume the small one
    if vmem >= 100 * _MIB:                     # v5e / v6e: 128 MiB physical VMEM
        return 32 * _MIB, 80 * _MIB
    return 16 * _MIB, 48 * _MIB                # v7x: 64 MiB per TensorCore


def _choose_tiles(B, D, itemsize, budget):
    """Pick (tb, tk) = (batch rows, z-dim cols) per grid step from the budget."""
    d_pad = _round_up(D, _LANE)                # lanes pad to 128 inside VMEM
    # 2 inputs x 2 pipeline buffers.
    tb_full_d = _round_down(budget // (4 * d_pad * itemsize), _LANE)
    if tb_full_d >= _LANE:
        tb, tk = tb_full_d, D                  # full D per step, single K block
    else:
        # Huge D: bound per-step VMEM with a K axis over D; keep tb moderate.
        tb = 256 if B >= 512 else _LANE
        tk = min(d_pad, max(_LANE, _round_down(budget // (4 * tb * itemsize), _LANE)))

    # v7x has 2 TensorCores: keep >= 2 batch blocks when the batch allows it,
    # so dimension_semantics=("parallel", ...) actually shards work.
    if B >= 2 * _LANE:
        tb = min(tb, max(_LANE, _round_down(_round_up(B, _LANE) // 2, _LANE)))
    # A single block covering the whole (small) batch is legal: a block dim
    # equal to the full array dim satisfies the TPU tiling constraint.
    if tb >= B:
        tb = B
    return tb, tk


def _lossy_z_kernel(zhat_ref, zmean_ref, out_ref, acc_ref, *,
                    p_norm: float, d_total: int, tk: int):
    k = pl.program_id(1)
    nk = pl.num_programs(1)

    @pl.when(k == 0)
    def _():
        acc_ref[...] = jnp.zeros_like(acc_ref)

    # (tb, tk) tile; math in f32 regardless of HBM dtype (v5e has no bf16 VALU).
    diff = (zhat_ref[...].astype(jnp.float32)
            - zmean_ref[...].astype(jnp.float32) + _EPS)

    if p_norm == 1.0:
        powd = jnp.abs(diff)                   # VPU only
    elif p_norm == 2.0:
        powd = diff * diff                     # VPU only
    else:
        powd = jnp.abs(diff) ** p_norm         # exp/log on EUP; exotic p only

    # Partial last K block: mask junk columns so they can't pollute valid rows.
    # (Partial *batch* rows need no mask: the reduction is strictly per-row and
    # junk output lanes are sliced off by the wrapper.)
    if d_total % tk != 0:
        col = jax.lax.broadcasted_iota(jnp.int32, powd.shape, 1)
        powd = jnp.where(col < (d_total - k * tk), powd, 0.0)

    # Per-row sum, landed lane-major as (1, tb):
    #   1) exact-f32 VALU pre-reduction of 128-lane column groups,
    #   2) ones(1, C) MXU contraction of the small remainder (same pattern as
    #      q @ k.T) -> lane-dense output, no full-tile transpose.
    cols = powd.shape[-1]
    if cols % _LANE == 0 and cols > _LANE:
        pre = powd[:, :_LANE]
        for g in range(1, cols // _LANE):
            pre = pre + powd[:, g * _LANE:(g + 1) * _LANE]
    else:
        # TODO(synk): large D that is not a multiple of 128 skips the VALU
        # pre-reduction and contracts (tb, D) directly (rare; still correct).
        pre = powd

    ones_row = jnp.ones((1, pre.shape[-1]), jnp.float32)
    red = jax.lax.dot_general(
        ones_row, pre,
        dimension_numbers=(((1,), (1,)), ((), ())),
        preferred_element_type=jnp.float32,
        precision=jax.lax.Precision.HIGHEST,   # cheap on the pre-reduced tile
    )                                          # (1, tb)

    acc_ref[...] += red

    @pl.when(k == nk - 1)
    def _():
        total = acc_ref[...]
        if p_norm == 1.0:
            dist = total
        elif p_norm == 2.0:
            dist = jnp.sqrt(total)             # single EUP op on the reduced row
        else:
            dist = total ** (1.0 / p_norm)
        out_ref[...] = dist.reshape(out_ref.shape).astype(out_ref.dtype)


def lossy_z_distortion(z_hat, z_mean, p_norm: float = 1.0):
    """Pallas implementation of LossyZDistortion.forward.

    z_hat  : [B, D] reconstructed representations
    z_mean : [B, D] mean of p_Zlx.base_dist (the target z)
    returns (dist [B], logs {}, other {})
    """
    B, D = z_hat.shape
    assert z_mean.shape == (B, D)

    out_dtype = jnp.promote_types(z_hat.dtype, z_mean.dtype)
    itemsize = max(jnp.dtype(z_hat.dtype).itemsize,
                   jnp.dtype(z_mean.dtype).itemsize)
    budget, vmem_limit = _vmem_budget()
    tb, tk = _choose_tiles(B, D, itemsize, budget)
    nb = pl.cdiv(B, tb)
    nk = pl.cdiv(D, tk)

    kernel = functools.partial(_lossy_z_kernel, p_norm=float(p_norm),
                               d_total=D, tk=tk)

    flops = 4 * B * D
    if p_norm == 1.0:
        transcendentals = 0
    elif p_norm == 2.0:
        transcendentals = B
    else:
        transcendentals = 2 * B * D + B

    out3 = pl.pallas_call(
        kernel,
        out_shape=jax.ShapeDtypeStruct((nb, 1, tb), out_dtype),
        grid_spec=pltpu.PrefetchScalarGridSpec(
            num_scalar_prefetch=0,
            grid=(nb, nk),
            in_specs=[
                pl.BlockSpec((tb, tk), lambda i, k: (i, k)),
                pl.BlockSpec((tb, tk), lambda i, k: (i, k)),
            ],
            out_specs=pl.BlockSpec((1, 1, tb), lambda i, k: (i, 0, 0)),
            scratch_shapes=[pltpu.VMEM((1, tb), jnp.float32)],
        ),
        compiler_params=pltpu.CompilerParams(
            dimension_semantics=("parallel", "arbitrary"),
            vmem_limit_bytes=vmem_limit,
        ),
        cost_estimate=pl.CostEstimate(
            flops=flops,
            transcendentals=transcendentals,
            bytes_accessed=2 * B * D * itemsize + B * jnp.dtype(out_dtype).itemsize,
        ),
    )(z_hat, z_mean)

    dist = out3.reshape(nb * tb)[:B]
    logs = {}
    other = {}
    return dist, logs, other


if __name__ == "__main__":
    key = jax.random.PRNGKey(0)
    k1, k2 = jax.random.split(key)

    B, D = 2, 32  # batch_size, z_dim
    z_hat = jax.random.normal(k1, (B, D), dtype=jnp.float32)
    # p_Zlx.base_dist.mean — the encoded distribution's mean (the target z)
    z_mean = jax.random.normal(k2, (B, D), dtype=jnp.float32)

    # p = 1 (module default)
    dist1, logs, other = lossy_z_distortion(z_hat, z_mean, p_norm=1.0)
    dist1 = jax.block_until_ready(dist1)
    ref1 = jnp.sum(jnp.abs(z_hat - z_mean + _EPS), axis=-1)
    assert dist1.shape == (B,)
    assert jnp.allclose(dist1, ref1, rtol=1e-4, atol=1e-4)

    # p = 2 specialization
    dist2, _, _ = lossy_z_distortion(z_hat, z_mean, p_norm=2.0)
    dist2 = jax.block_until_ready(dist2)
    ref2 = jnp.sqrt(jnp.sum((z_hat - z_mean + _EPS) ** 2, axis=-1))
    assert dist2.shape == (B,)
    assert jnp.allclose(dist2, ref2, rtol=1e-4, atol=1e-4)

    print("KERNEL_OK")
</pallas_src>

<mosaic_0001>
module attributes {stable_mosaic.version = 11 : i64} {
  func.func @_lossy_z_kernel(%arg0: i32, %arg1: i32, %arg2: memref<2x32xf32, #tpu.memory_space<vmem>>, %arg3: memref<2x32xf32, #tpu.memory_space<vmem>>, %arg4: memref<1x1x2xf32, #tpu.memory_space<vmem>>, %arg5: memref<1x2xf32, #tpu.memory_space<vmem>>) attributes {dimension_semantics = [#tpu.dimension_semantics<parallel>, #tpu.dimension_semantics<arbitrary>], iteration_bounds = array<i64: 1, 1>, scalar_prefetch = 0 : i64, scratch_operands = 1 : i64, tpu.core_type = #tpu.core_type<tc>, window_params = [{transform_indices = @transform_0, window_bounds = array<i64: 2, 32>}, {transform_indices = @transform_1, window_bounds = array<i64: 2, 32>}, {transform_indices = @transform_2, window_bounds = array<i64: 1, 1, 2>}]} {
    %c0_i32 = arith.constant 0 : i32
    %0 = arith.cmpi eq, %arg1, %c0_i32 : i32
    %1 = arith.extui %0 : i1 to i32
    %c0_i32_0 = arith.constant 0 : i32
    %2 = arith.cmpi ne, %1, %c0_i32_0 : i32
    scf.if %2 {
      %cst_12 = arith.constant 0.000000e+00 : f32
      %17 = vector.broadcast %cst_12 : f32 to vector<1x2xf32>
      %c0_13 = arith.constant 0 : index
      %c0_14 = arith.constant 0 : index
      %18 = vector.load %arg5[%c0_13, %c0_14] : memref<1x2xf32, #tpu.memory_space<vmem>>, vector<1x2xf32>
      tpu.vector_store %arg5[%c0_13, %c0_14], %17 {strides = array<i32>} : memref<1x2xf32, #tpu.memory_space<vmem>>, vector<1x2xf32>,
    } else {
    }
    %c0 = arith.constant 0 : index
    %c0_1 = arith.constant 0 : index
    %3 = vector.load %arg2[%c0, %c0_1] : memref<2x32xf32, #tpu.memory_space<vmem>>, vector<2x32xf32>
    %c0_2 = arith.constant 0 : index
    %c0_3 = arith.constant 0 : index
    %4 = vector.load %arg3[%c0_2, %c0_3] : memref<2x32xf32, #tpu.memory_space<vmem>>, vector<2x32xf32>
    %5 = arith.subf %3, %4 : vector<2x32xf32>
    %cst = arith.constant 9.99999997E-7 : f32
    %6 = vector.broadcast %cst : f32 to vector<2x32xf32>
    %7 = arith.addf %5, %6 : vector<2x32xf32>
    %8 = math.absf %7 : vector<2x32xf32>
    %cst_4 = arith.constant 1.000000e+00 : f32
    %9 = vector.broadcast %cst_4 : f32 to vector<1x32xf32>
    %cst_5 = arith.constant dense<0.000000e+00> : vector<1x2xf32>
    %10 = tpu.matmul %9, %8, %cst_5 {dimension_numbers = #tpu.dot_dimension_numbers<[1], [1], [0], [0], [0, 0, 1, 0], [], []>, precision = #tpu.contract_precision<fp32>} : vector<1x32xf32>, vector<2x32xf32>, vector<1x2xf32> -> vector<1x2xf32>
    %c0_6 = arith.constant 0 : index
    %c0_7 = arith.constant 0 : index
    %11 = vector.load %arg5[%c0_6, %c0_7] : memref<1x2xf32, #tpu.memory_space<vmem>>, vector<1x2xf32>
    %12 = arith.addf %11, %10 : vector<1x2xf32>
    %c0_8 = arith.constant 0 : index
    %c0_9 = arith.constant 0 : index
    %13 = vector.load %arg5[%c0_8, %c0_9] : memref<1x2xf32, #tpu.memory_space<vmem>>, vector<1x2xf32>
    tpu.vector_store %arg5[%c0_8, %c0_9], %12 {strides = array<i32>} : memref<1x2xf32, #tpu.memory_space<vmem>>, vector<1x2xf32>,
    %c0_i32_10 = arith.constant 0 : i32
    %14 = arith.cmpi eq, %arg1, %c0_i32_10 : i32
    %15 = arith.extui %14 : i1 to i32
    %c0_i32_11 = arith.constant 0 : i32
    %16 = arith.cmpi ne, %15, %c0_i32_11 : i32
    scf.if %16 {
      %c0_12 = arith.constant 0 : index
      %c0_13 = arith.constant 0 : index
      %17 = vector.load %arg5[%c0_12, %c0_13] : memref<1x2xf32, #tpu.memory_space<vmem>>, vector<1x2xf32>
      %18 = vector.shape_cast %17 : vector<1x2xf32> to vector<1x1x2xf32>
      %c0_14 = arith.constant 0 : index
      %c0_15 = arith.constant 0 : index
      %c0_16 = arith.constant 0 : index
      %19 = vector.load %arg4[%c0_14, %c0_15, %c0_16] : memref<1x1x2xf32, #tpu.memory_space<vmem>>, vector<1x1x2xf32>
      tpu.vector_store %arg4[%c0_14, %c0_15, %c0_16], %18 {strides = array<i32>} : memref<1x1x2xf32, #tpu.memory_space<vmem>>, vector<1x1x2xf32>,
    } else {
    }
    return
  }
  func.func @transform_0(%arg0: i32, %arg1: i32) -> (i32, i32) {
    %c0_i32 = arith.constant 0 : i32
    return %arg0, %arg1 : i32, i32
  }
  func.func @transform_1(%arg0: i32, %arg1: i32) -> (i32, i32) {
    %c0_i32 = arith.constant 0 : i32
    return %arg0, %arg1 : i32, i32
  }
  func.func @transform_2(%arg0: i32, %arg1: i32) -> (i32, i32, i32) {
    %c0_i32 = arith.constant 0 : i32
    %c0_i32_0 = arith.constant 0 : i32
    %c0_i32_1 = arith.constant 0 : i32
    return %arg0, %c0_i32, %c0_i32_0 : i32, i32, i32
  }
}

</mosaic_0001>

<llo_original>
// kernel: tpu_custom_call.1
$region0: #{tpu_custom_call.1}
  #allocation0 [shape = 'u32[]', space=smem, size = 0x4, offset = 0x4, fixed_abs, tag = 'smem constant byte address 0x4 - core index']
  #allocation1 [shape = 'u32[144,128]{1,0:T(1,128)}', space=vmem, size = 0x12000, scoped, tag = 'internal scratch']
  #allocation2 [shape = 'f32[1,2]{1,0:T(1,128)}', space=vmem, size = 0x200, scoped, tag = 'scratch operand']
  %s0 = inlined_call_operand.hbm [shape: f32[2,32], index: 0, kind: input, shape index: {}]
  %s1 = inlined_call_operand.vmem [shape: f32[2,32], index: 1, kind: input, shape index: {}]
  %s2 = inlined_call_operand.hbm [shape: f32[1,1,2], index: 2, kind: output, shape index: {}]
  %s3 = sld [smem:[#allocation0]]
  $region30: #{tpu_custom_call.1} parent=0
    _
  %s5 = ssub.s32 1, %s3
  %s6 = scalar_select 0, %s5, %s3
  $region1: #{tpu_custom_call.1} parent=0
    #allocation3 [shape = 'u8[1024]{0}', space=vmem, size = 0x400, scoped, tag = 'input window, operand 0, single buffered']
    #allocation4 [shape = 's32[1]{0}', space=sflag, size = 0x4, scoped, tag = 'scoped memory for tpu_custom_call.1']
    #allocation5 [shape = 's32[1]{0}', space=sflag, size = 0x4, scoped, tag = 'scoped memory for tpu_custom_call.1']
    #allocation6 [shape = 'u8[512]{0}', space=vmem, size = 0x400, scoped, tag = 'output window, operand 0, single buffered']
    %7 = vsyncpa [#allocation4], 0
    %8 = vsyncpa [#allocation5], 0
    // Predicated region
    $region2: #{tpu_custom_call.1} parent=1 // pred_check
      _
    $region3: #{tpu_custom_call.1} parent=1 // pred_check_branch
      %10 = sbr.rel (0) target = $region5
    $region4: #{tpu_custom_call.1} parent=1 // pred_region
      %s12 = ssub.s32 32, 32
      %13 = vsyncadd [#allocation4], %s12
      %s15 = sshll.u32 [#allocation3], 4
      %s16 = int_to_ptr.vmem [resolvable:$true] %s15
      %18 = dma.hbm_to_vmem [thread:$0]  %s0, 32, %s16, [#allocation4]
    $region5: #{tpu_custom_call.1} parent=1 // pred_fallthru
      _
    // Predicated region
    $region6: #{tpu_custom_call.1} parent=1 // pred_check
      _
    $region7: #{tpu_custom_call.1} parent=1 // pred_check_branch
      %20 = sbr.rel (0) target = $region9
    $region8: #{tpu_custom_call.1} parent=1 // pred_region
      _
    $region9: #{tpu_custom_call.1} parent=1 // pred_fallthru
      _
    // Predicated region
    $region10: #{tpu_custom_call.1} parent=1 // pred_check
      _
    $region11: #{tpu_custom_call.1} parent=1 // pred_check_branch
      %22 = sbr.rel (0) target = $region13
    $region12: #{tpu_custom_call.1} parent=1 // pred_region
      %23 = dma.done [#allocation4], 32
    $region13: #{tpu_custom_call.1} parent=1 // pred_fallthru
      _
    %p24 = scmp.eq.s32.totalorder 0, 0
    // Predicated region
    $region14: #{tpu_custom_call.1} parent=1 // pred_check
      %p25 = pneg %p24
    $region15: #{tpu_custom_call.1} parent=1 // pred_check_branch
      %27 = sbr.rel (%p25) target = $region17
    $region16: #{tpu_custom_call.1} parent=1 // pred_region
      %vm28 = vcmask 8192
      %29 = vst.msk [vmem:[#allocation2] sm:$0x1] %vm28, 0.0
    $region17: #{tpu_custom_call.1} parent=1 // pred_fallthru
      _
    %v30 = vld [vmem:[#allocation3] sm:$0x3]
    %v31 = vld [vmem:[%s1] sm:$0x3]
    %v32 = vsub.f32 %v30, %v31
    %v33 = vadd.f32 %v32, 1e-06
    %v34 = vand.u32 2147483647, %v33
    %vm35 = vcmask 261120
    %v37 = vsel %vm35, 1.0, 0
    %v40 = vsel %vm35, %v34, 0
    %42 = vmatprep.subr.mxu0 0.0
    %v43 = vand.u32 %v40, 4294901760
    %44 = vmatpush1.xpose.msra.mxu0 %v43
    %45 = vmatprep.subr.mxu0 0.0
    %46 = vmatpush1.xpose.msra.mxu0 0.0
    %47 = vmatprep.subr.mxu0 0.0
    %48 = vmatpush1.xpose.msra.mxu0 0.0
    %49 = vmatprep.subr.mxu0 0.0
    %50 = vmatpush1.xpose.msra.mxu0 0.0
    %51 = vmatprep.subr.mxu0 0.0
    %52 = vmatpush1.xpose.msra.mxu0 0.0
    %53 = vmatprep.subr.mxu0 0.0
    %54 = vmatpush1.xpose.msra.mxu0 0.0
    %55 = vmatprep.subr.mxu0 0.0
    %56 = vmatpush1.xpose.msra.mxu0 0.0
    %57 = vmatprep.subr.mxu0 0.0
    %58 = vmatpush1.xpose.msra.mxu0 0.0
    %59 = vmatprep.subr.mxu0 0.0
    %60 = vmatpush1.xpose.msra.mxu0 0.0
    %61 = vmatprep.subr.mxu0 0.0
    %62 = vmatpush1.xpose.msra.mxu0 0.0
    %63 = vmatprep.subr.mxu0 0.0
    %64 = vmatpush1.xpose.msra.mxu0 0.0
    %65 = vmatprep.subr.mxu0 0.0
    %66 = vmatpush1.xpose.msra.mxu0 0.0
    %67 = vmatprep.subr.mxu0 0.0
    %68 = vmatpush1.xpose.msra.mxu0 0.0
    %69 = vmatprep.subr.mxu0 0.0
    %70 = vmatpush1.xpose.msra.mxu0 0.0
    %71 = vmatprep.subr.mxu0 0.0
    %72 = vmatpush1.xpose.msra.mxu0 0.0
    %73 = vmatprep.subr.mxu0 0.0
    %74 = vmatpush1.xpose.msra.mxu0 0.0
    %75 = vmatprep.subr.mxu0 0.0
    %76 = vmatpush1.xpose.msra.mxu0 0.0
    %77 = vmatprep.subr.mxu0 0.0
    %78 = vmatpush1.xpose.msra.mxu0 0.0
    %79 = vmatprep.subr.mxu0 0.0
    %80 = vmatpush1.xpose.msra.mxu0 0.0
    %81 = vmatprep.subr.mxu0 0.0
    %82 = vmatpush1.xpose.msra.mxu0 0.0
    %83 = vmatprep.subr.mxu0 0.0
    %84 = vmatpush1.xpose.msra.mxu0 0.0
    %85 = vmatprep.subr.mxu0 0.0
    %86 = vmatpush1.xpose.msra.mxu0 0.0
    %87 = vmatprep.subr.mxu0 0.0
    %88 = vmatpush1.xpose.msra.mxu0 0.0
    %89 = vmatprep.subr.mxu0 0.0
    %90 = vmatpush1.xpose.msra.mxu0 0.0
    %91 = vmatprep.subr.mxu0 0.0
    %92 = vmatpush1.xpose.msra.mxu0 0.0
    %93 = vmatprep.subr.mxu0 0.0
    %94 = vmatpush1.xpose.msra.mxu0 0.0
    %95 = vmatprep.subr.mxu0 0.0
    %96 = vmatpush1.xpose.msra.mxu0 0.0
    %97 = vmatprep.subr.mxu0 0.0
    %98 = vmatpush1.xpose.msra.mxu0 0.0
    %99 = vmatprep.subr.mxu0 0.0
    %100 = vmatpush1.xpose.msra.mxu0 0.0
    %101 = vmatprep.subr.mxu0 0.0
    %102 = vmatpush1.xpose.msra.mxu0 0.0
    %103 = vmatprep.subr.mxu0 0.0
    %104 = vmatpush1.xpose.msra.mxu0 0.0
    %105 = vmatprep.subr.mxu0 0.0
    %106 = vmatpush1.xpose.msra.mxu0 0.0
    %107 = vmatprep.mubr.f32.mxu0 0.0
    %v108 = vand.u32 %v37, 4294901760
    %v109 = vsub.f32 %v37, %v108
    %v110 = vand.u32 %v109, 4294901760
    %v111 = vsub.f32 %v109, %v110
    %v112 = vand.u32 %v111, 4294901760
    %113 = vmatmul.mubr.f32.gmra.mrb[0].mxu0 %v112
    %v114 = vpop.f32.mrb[0].mxu0
    %v115 = vadd.f32 0.0, %v114
    %v116 = vpop.f32.mrb[0].mxu0
    %117 = vdwg.mxu0
    %118 = vmatprep.subr.mxu0 0.0
    %v119 = vand.u32 %v40, 4294901760
    %v120 = vsub.f32 %v40, %v119
    %v121 = vand.u32 %v120, 4294901760
    %v122 = vsub.f32 %v120, %v121
    %v123 = vand.u32 %v122, 4294901760
    %124 = vmatpush1.xpose.msra.mxu0 %v123
    %125 = vmatprep.subr.mxu0 0.0
    %126 = vmatpush1.xpose.msra.mxu0 0.0
    %127 = vmatprep.subr.mxu0 0.0
    %128 = vmatpush1.xpose.msra.mxu0 0.0
    %129 = vmatprep.subr.mxu0 0.0
    %130 = vmatpush1.xpose.msra.mxu0 0.0
    %131 = vmatprep.subr.mxu0 0.0
    %132 = vmatpush1.xpose.msra.mxu0 0.0
    %133 = vmatprep.subr.mxu0 0.0
    %134 = vmatpush1.xpose.msra.mxu0 0.0
    %135 = vmatprep.subr.mxu0 0.0
    %136 = vmatpush1.xpose.msra.mxu0 0.0
    %137 = vmatprep.subr.mxu0 0.0
    %138 = vmatpush1.xpose.msra.mxu0 0.0
    %139 = vmatprep.subr.mxu0 0.0
    %140 = vmatpush1.xpose.msra.mxu0 0.0
    %141 = vmatprep.subr.mxu0 0.0
    %142 = vmatpush1.xpose.msra.mxu0 0.0
    %143 = vmatprep.subr.mxu0 0.0
    %144 = vmatpush1.xpose.msra.mxu0 0.0
    %145 = vmatprep.subr.mxu0 0.0
    %146 = vmatpush1.xpose.msra.mxu0 0.0
    %147 = vmatprep.subr.mxu0 0.0
    %148 = vmatpush1.xpose.msra.mxu0 0.0
    %149 = vmatprep.subr.mxu0 0.0
    %150 = vmatpush1.xpose.msra.mxu0 0.0
    %151 = vmatprep.subr.mxu0 0.0
    %152 = vmatpush1.xpose.msra.mxu0 0.0
    %153 = vmatprep.subr.mxu0 0.0
    %154 = vmatpush1.xpose.msra.mxu0 0.0
    %155 = vmatprep.subr.mxu0 0.0
    %156 = vmatpush1.xpose.msra.mxu0 0.0
    %157 = vmatprep.subr.mxu0 0.0
    %158 = vmatpush1.xpose.msra.mxu0 0.0
    %159 = vmatprep.subr.mxu0 0.0
    %160 = vmatpush1.xpose.msra.mxu0 0.0
    %161 = vmatprep.subr.mxu0 0.0
    %162 = vmatpush1.xpose.msra.mxu0 0.0
    %163 = vmatprep.subr.mxu0 0.0
    %164 = vmatpush1.xpose.msra.mxu0 0.0
    %165 = vmatprep.subr.mxu0 0.0
    %166 = vmatpush1.xpose.msra.mxu0 0.0
    %167 = vmatprep.subr.mxu0 0.0
    %168 = vmatpush1.xpose.msra.mxu0 0.0
    %169 = vmatprep.subr.mxu0 0.0
    %170 = vmatpush1.xpose.msra.mxu0 0.0
    %171 = vmatprep.subr.mxu0 0.0
    %172 = vmatpush1.xpose.msra.mxu0 0.0
    %173 = vmatprep.subr.mxu0 0.0
    %174 = vmatpush1.xpose.msra.mxu0 0.0
    %175 = vmatprep.subr.mxu0 0.0
    %176 = vmatpush1.xpose.msra.mxu0 0.0
    %177 = vmatprep.subr.mxu0 0.0
    %178 = vmatpush1.xpose.msra.mxu0 0.0
    %179 = vmatprep.subr.mxu0 0.0
    %180 = vmatpush1.xpose.msra.mxu0 0.0
    %181 = vmatprep.subr.mxu0 0.0
    %182 = vmatpush1.xpose.msra.mxu0 0.0
    %183 = vmatprep.subr.mxu0 0.0
    %184 = vmatpush1.xpose.msra.mxu0 0.0
    %185 = vmatprep.subr.mxu0 0.0
    %186 = vmatpush1.xpose.msra.mxu0 0.0
    %187 = vmatprep.mubr.f32.mxu0 0.0
    %v188 = vand.u32 %v37, 4294901760
    %189 = vmatmul.mubr.f32.gmra.mrb[0].mxu0 %v188
    %v190 = vpop.f32.mrb[0].mxu0
    %v191 = vadd.f32 %v115, %v190
    %v192 = vpop.f32.mrb[0].mxu0
    %193 = vdwg.mxu0
    %194 = vmatprep.subr.mxu0 0.0
    %v195 = vand.u32 %v40, 4294901760
    %v196 = vsub.f32 %v40, %v195
    %197 = vmatpush1.xpose.msra.mxu0 %v196
    %198 = vmatprep.subr.mxu0 0.0
    %199 = vmatpush1.xpose.msra.mxu0 0.0
    %200 = vmatprep.subr.mxu0 0.0
    %201 = vmatpush1.xpose.msra.mxu0 0.0
    %202 = vmatprep.subr.mxu0 0.0
    %203 = vmatpush1.xpose.msra.mxu0 0.0
    %204 = vmatprep.subr.mxu0 0.0
    %205 = vmatpush1.xpose.msra.mxu0 0.0
    %206 = vmatprep.subr.mxu0 0.0
    %207 = vmatpush1.xpose.msra.mxu0 0.0
    %208 = vmatprep.subr.mxu0 0.0
    %209 = vmatpush1.xpose.msra.mxu0 0.0
    %210 = vmatprep.subr.mxu0 0.0
    %211 = vmatpush1.xpose.msra.mxu0 0.0
    %212 = vmatprep.subr.mxu0 0.0
    %213 = vmatpush1.xpose.msra.mxu0 0.0
    %214 = vmatprep.subr.mxu0 0.0
    %215 = vmatpush1.xpose.msra.mxu0 0.0
    %216 = vmatprep.subr.mxu0 0.0
    %217 = vmatpush1.xpose.msra.mxu0 0.0
    %218 = vmatprep.subr.mxu0 0.0
    %219 = vmatpush1.xpose.msra.mxu0 0.0
    %220 = vmatprep.subr.mxu0 0.0
    %221 = vmatpush1.xpose.msra.mxu0 0.0
    %222 = vmatprep.subr.mxu0 0.0
    %223 = vmatpush1.xpose.msra.mxu0 0.0
    %224 = vmatprep.subr.mxu0 0.0
    %225 = vmatpush1.xpose.msra.mxu0 0.0
    %226 = vmatprep.subr.mxu0 0.0
    %227 = vmatpush1.xpose.msra.mxu0 0.0
    %228 = vmatprep.subr.mxu0 0.0
    %229 = vmatpush1.xpose.msra.mxu0 0.0
    %230 = vmatprep.subr.mxu0 0.0
    %231 = vmatpush1.xpose.msra.mxu0 0.0
    %232 = vmatprep.subr.mxu0 0.0
    %233 = vmatpush1.xpose.msra.mxu0 0.0
    %234 = vmatprep.subr.mxu0 0.0
    %235 = vmatpush1.xpose.msra.mxu0 0.0
    %236 = vmatprep.subr.mxu0 0.0
    %237 = vmatpush1.xpose.msra.mxu0 0.0
    %238 = vmatprep.subr.mxu0 0.0
    %239 = vmatpush1.xpose.msra.mxu0 0.0
    %240 = vmatprep.subr.mxu0 0.0
    %241 = vmatpush1.xpose.msra.mxu0 0.0
    %242 = vmatprep.subr.mxu0 0.0
    %243 = vmatpush1.xpose.msra.mxu0 0.0
    %244 = vmatprep.subr.mxu0 0.0
    %245 = vmatpush1.xpose.msra.mxu0 0.0
    %246 = vmatprep.subr.mxu0 0.0
    %247 = vmatpush1.xpose.msra.mxu0 0.0
    %248 = vmatprep.subr.mxu0 0.0
    %249 = vmatpush1.xpose.msra.mxu0 0.0
    %250 = vmatprep.subr.mxu0 0.0
    %251 = vmatpush1.xpose.msra.mxu0 0.0
    %252 = vmatprep.subr.mxu0 0.0
    %253 = vmatpush1.xpose.msra.mxu0 0.0
    %254 = vmatprep.subr.mxu0 0.0
    %255 = vmatpush1.xpose.msra.mxu0 0.0
    %256 = vmatprep.subr.mxu0 0.0
    %257 = vmatpush1.xpose.msra.mxu0 0.0
    %258 = vmatprep.subr.mxu0 0.0
    %259 = vmatpush1.xpose.msra.mxu0 0.0
    %260 = vmatprep.mubr.f32.mxu0 0.0
    %v261 = vand.u32 %v37, 4294901760
    %v262 = vsub.f32 %v37, %v261
    %263 = vmatmul.mubr.f32.gmra.mrb[0].mxu0 %v262
    %v264 = vpop.f32.mrb[0].mxu0
    %v265 = vadd.f32 %v191, %v264
    %v266 = vpop.f32.mrb[0].mxu0
    %267 = vdwg.mxu0
    %268 = vmatprep.subr.mxu0 0.0
    %v269 = vand.u32 %v40, 4294901760
    %270 = vmatpush1.xpose.msra.mxu0 %v269
    %271 = vmatprep.subr.mxu0 0.0
    %272 = vmatpush1.xpose.msra.mxu0 0.0
    %273 = vmatprep.subr.mxu0 0.0
    %274 = vmatpush1.xpose.msra.mxu0 0.0
    %275 = vmatprep.subr.mxu0 0.0
    %276 = vmatpush1.xpose.msra.mxu0 0.0
    %277 = vmatprep.subr.mxu0 0.0
    %278 = vmatpush1.xpose.msra.mxu0 0.0
    %279 = vmatprep.subr.mxu0 0.0
    %280 = vmatpush1.xpose.msra.mxu0 0.0
    %281 = vmatprep.subr.mxu0 0.0
    %282 = vmatpush1.xpose.msra.mxu0 0.0
    %283 = vmatprep.subr.mxu0 0.0
    %284 = vmatpush1.xpose.msra.mxu0 0.0
    %285 = vmatprep.subr.mxu0 0.0
    %286 = vmatpush1.xpose.msra.mxu0 0.0
    %287 = vmatprep.subr.mxu0 0.0
    %288 = vmatpush1.xpose.msra.mxu0 0.0
    %289 = vmatprep.subr.mxu0 0.0
    %290 = vmatpush1.xpose.msra.mxu0 0.0
    %291 = vmatprep.subr.mxu0 0.0
    %292 = vmatpush1.xpose.msra.mxu0 0.0
    %293 = vmatprep.subr.mxu0 0.0
    %294 = vmatpush1.xpose.msra.mxu0 0.0
    %295 = vmatprep.subr.mxu0 0.0
    %296 = vmatpush1.xpose.msra.mxu0 0.0
    %297 = vmatprep.subr.mxu0 0.0
    %298 = vmatpush1.xpose.msra.mxu0 0.0
    %299 = vmatprep.subr.mxu0 0.0
    %300 = vmatpush1.xpose.msra.mxu0 0.0
    %301 = vmatprep.subr.mxu0 0.0
    %302 = vmatpush1.xpose.msra.mxu0 0.0
    %303 = vmatprep.subr.mxu0 0.0
    %304 = vmatpush1.xpose.msra.mxu0 0.0
    %305 = vmatprep.subr.mxu0 0.0
    %306 = vmatpush1.xpose.msra.mxu0 0.0
    %307 = vmatprep.subr.mxu0 0.0
    %308 = vmatpush1.xpose.msra.mxu0 0.0
    %309 = vmatprep.subr.mxu0 0.0
    %310 = vmatpush1.xpose.msra.mxu0 0.0
    %311 = vmatprep.subr.mxu0 0.0
    %312 = vmatpush1.xpose.msra.mxu0 0.0
    %313 = vmatprep.subr.mxu0 0.0
    %314 = vmatpush1.xpose.msra.mxu0 0.0
    %315 = vmatprep.subr.mxu0 0.0
    %316 = vmatpush1.xpose.msra.mxu0 0.0
    %317 = vmatprep.subr.mxu0 0.0
    %318 = vmatpush1.xpose.msra.mxu0 0.0
    %319 = vmatprep.subr.mxu0 0.0
    %320 = vmatpush1.xpose.msra.mxu0 0.0
    %321 = vmatprep.subr.mxu0 0.0
    %322 = vmatpush1.xpose.msra.mxu0 0.0
    %323 = vmatprep.subr.mxu0 0.0
    %324 = vmatpush1.xpose.msra.mxu0 0.0
    %325 = vmatprep.subr.mxu0 0.0
    %326 = vmatpush1.xpose.msra.mxu0 0.0
    %327 = vmatprep.subr.mxu0 0.0
    %328 = vmatpush1.xpose.msra.mxu0 0.0
    %329 = vmatprep.subr.mxu0 0.0
    %330 = vmatpush1.xpose.msra.mxu0 0.0
    %331 = vmatprep.subr.mxu0 0.0
    %332 = vmatpush1.xpose.msra.mxu0 0.0
    %333 = vmatprep.mubr.f32.mxu0 0.0
    %v334 = vand.u32 %v37, 4294901760
    %v335 = vsub.f32 %v37, %v334
    %v336 = vand.u32 %v335, 4294901760
    %337 = vmatmul.mubr.f32.gmra.mrb[0].mxu0 %v336
    %v338 = vpop.f32.mrb[0].mxu0
    %v339 = vadd.f32 %v265, %v338
    %v340 = vpop.f32.mrb[0].mxu0
    %341 = vdwg.mxu0
    %342 = vmatprep.subr.mxu0 0.0
    %v343 = vand.u32 %v40, 4294901760
    %v344 = vsub.f32 %v40, %v343
    %v345 = vand.u32 %v344, 4294901760
    %346 = vmatpush1.xpose.msra.mxu0 %v345
    %347 = vmatprep.subr.mxu0 0.0
    %348 = vmatpush1.xpose.msra.mxu0 0.0
    %349 = vmatprep.subr.mxu0 0.0
    %350 = vmatpush1.xpose.msra.mxu0 0.0
    %351 = vmatprep.subr.mxu0 0.0
    %352 = vmatpush1.xpose.msra.mxu0 0.0
    %353 = vmatprep.subr.mxu0 0.0
    %354 = vmatpush1.xpose.msra.mxu0 0.0
    %355 = vmatprep.subr.mxu0 0.0
    %356 = vmatpush1.xpose.msra.mxu0 0.0
    %357 = vmatprep.subr.mxu0 0.0
    %358 = vmatpush1.xpose.msra.mxu0 0.0
    %359 = vmatprep.subr.mxu0 0.0
    %360 = vmatpush1.xpose.msra.mxu0 0.0
    %361 = vmatprep.subr.mxu0 0.0
    %362 = vmatpush1.xpose.msra.mxu0 0.0
    %363 = vmatprep.subr.mxu0 0.0
    %364 = vmatpush1.xpose.msra.mxu0 0.0
    %365 = vmatprep.subr.mxu0 0.0
    %366 = vmatpush1.xpose.msra.mxu0 0.0
    %367 = vmatprep.subr.mxu0 0.0
    %368 = vmatpush1.xpose.msra.mxu0 0.0
    %369 = vmatprep.subr.mxu0 0.0
    %370 = vmatpush1.xpose.msra.mxu0 0.0
    %371 = vmatprep.subr.mxu0 0.0
    %372 = vmatpush1.xpose.msra.mxu0 0.0
    %373 = vmatprep.subr.mxu0 0.0
    %374 = vmatpush1.xpose.msra.mxu0 0.0
    %375 = vmatprep.subr.mxu0 0.0
    %376 = vmatpush1.xpose.msra.mxu0 0.0
    %377 = vmatprep.subr.mxu0 0.0
    %378 = vmatpush1.xpose.msra.mxu0 0.0
    %379 = vmatprep.subr.mxu0 0.0
    %380 = vmatpush1.xpose.msra.mxu0 0.0
    %381 = vmatprep.subr.mxu0 0.0
    %382 = vmatpush1.xpose.msra.mxu0 0.0
    %383 = vmatprep.subr.mxu0 0.0
    %384 = vmatpush1.xpose.msra.mxu0 0.0
    %385 = vmatprep.subr.mxu0 0.0
    %386 = vmatpush1.xpose.msra.mxu0 0.0
    %387 = vmatprep.subr.mxu0 0.0
    %388 = vmatpush1.xpose.msra.mxu0 0.0
    %389 = vmatprep.subr.mxu0 0.0
    %390 = vmatpush1.xpose.msra.mxu0 0.0
    %391 = vmatprep.subr.mxu0 0.0
    %392 = vmatpush1.xpose.msra.mxu0 0.0
    %393 = vmatprep.subr.mxu0 0.0
    %394 = vmatpush1.xpose.msra.mxu0 0.0
    %395 = vmatprep.subr.mxu0 0.0
    %396 = vmatpush1.xpose.msra.mxu0 0.0
    %397 = vmatprep.subr.mxu0 0.0
    %398 = vmatpush1.xpose.msra.mxu0 0.0
    %399 = vmatprep.subr.mxu0 0.0
    %400 = vmatpush1.xpose.msra.mxu0 0.0
    %401 = vmatprep.subr.mxu0 0.0
    %402 = vmatpush1.xpose.msra.mxu0 0.0
    %403 = vmatprep.subr.mxu0 0.0
    %404 = vmatpush1.xpose.msra.mxu0 0.0
    %405 = vmatprep.subr.mxu0 0.0
    %406 = vmatpush1.xpose.msra.mxu0 0.0
    %407 = vmatprep.subr.mxu0 0.0
    %408 = vmatpush1.xpose.msra.mxu0 0.0
    %409 = vmatprep.mubr.f32.mxu0 0.0
    %v410 = vand.u32 %v37, 4294901760
    %411 = vmatmul.mubr.f32.gmra.mrb[0].mxu0 %v410
    %v412 = vpop.f32.mrb[0].mxu0
    %v413 = vadd.f32 %v339, %v412
    %v414 = vpop.f32.mrb[0].mxu0
    %415 = vdwg.mxu0
    %416 = vmatprep.subr.mxu0 0.0
    %v417 = vand.u32 %v40, 4294901760
    %418 = vmatpush1.xpose.msra.mxu0 %v417
    %419 = vmatprep.subr.mxu0 0.0
    %420 = vmatpush1.xpose.msra.mxu0 0.0
    %421 = vmatprep.subr.mxu0 0.0
    %422 = vmatpush1.xpose.msra.mxu0 0.0
    %423 = vmatprep.subr.mxu0 0.0
    %424 = vmatpush1.xpose.msra.mxu0 0.0
    %425 = vmatprep.subr.mxu0 0.0
    %426 = vmatpush1.xpose.msra.mxu0 0.0
    %427 = vmatprep.subr.mxu0 0.0
    %428 = vmatpush1.xpose.msra.mxu0 0.0
    %429 = vmatprep.subr.mxu0 0.0
    %430 = vmatpush1.xpose.msra.mxu0 0.0
    %431 = vmatprep.subr.mxu0 0.0
    %432 = vmatpush1.xpose.msra.mxu0 0.0
    %433 = vmatprep.subr.mxu0 0.0
    %434 = vmatpush1.xpose.msra.mxu0 0.0
    %435 = vmatprep.subr.mxu0 0.0
    %436 = vmatpush1.xpose.msra.mxu0 0.0
    %437 = vmatprep.subr.mxu0 0.0
    %438 = vmatpush1.xpose.msra.mxu0 0.0
    %439 = vmatprep.subr.mxu0 0.0
    %440 = vmatpush1.xpose.msra.mxu0 0.0
    %441 = vmatprep.subr.mxu0 0.0
    %442 = vmatpush1.xpose.msra.mxu0 0.0
    %443 = vmatprep.subr.mxu0 0.0
    %444 = vmatpush1.xpose.msra.mxu0 0.0
    %445 = vmatprep.subr.mxu0 0.0
    %446 = vmatpush1.xpose.msra.mxu0 0.0
    %447 = vmatprep.subr.mxu0 0.0
    %448 = vmatpush1.xpose.msra.mxu0 0.0
    %449 = vmatprep.subr.mxu0 0.0
    %450 = vmatpush1.xpose.msra.mxu0 0.0
    %451 = vmatprep.subr.mxu0 0.0
    %452 = vmatpush1.xpose.msra.mxu0 0.0
    %453 = vmatprep.subr.mxu0 0.0
    %454 = vmatpush1.xpose.msra.mxu0 0.0
    %455 = vmatprep.subr.mxu0 0.0
    %456 = vmatpush1.xpose.msra.mxu0 0.0
    %457 = vmatprep.subr.mxu0 0.0
    %458 = vmatpush1.xpose.msra.mxu0 0.0
    %459 = vmatprep.subr.mxu0 0.0
    %460 = vmatpush1.xpose.msra.mxu0 0.0
    %461 = vmatprep.subr.mxu0 0.0
    %462 = vmatpush1.xpose.msra.mxu0 0.0
    %463 = vmatprep.subr.mxu0 0.0
    %464 = vmatpush1.xpose.msra.mxu0 0.0
    %465 = vmatprep.subr.mxu0 0.0
    %466 = vmatpush1.xpose.msra.mxu0 0.0
    %467 = vmatprep.subr.mxu0 0.0
    %468 = vmatpush1.xpose.msra.mxu0 0.0
    %469 = vmatprep.subr.mxu0 0.0
    %470 = vmatpush1.xpose.msra.mxu0 0.0
    %471 = vmatprep.subr.mxu0 0.0
    %472 = vmatpush1.xpose.msra.mxu0 0.0
    %473 = vmatprep.subr.mxu0 0.0
    %474 = vmatpush1.xpose.msra.mxu0 0.0
    %475 = vmatprep.subr.mxu0 0.0
    %476 = vmatpush1.xpose.msra.mxu0 0.0
    %477 = vmatprep.subr.mxu0 0.0
    %478 = vmatpush1.xpose.msra.mxu0 0.0
    %479 = vmatprep.subr.mxu0 0.0
    %480 = vmatpush1.xpose.msra.mxu0 0.0
    %481 = vmatprep.mubr.f32.mxu0 0.0
    %v482 = vand.u32 %v37, 4294901760
    %483 = vmatmul.mubr.f32.gmra.mrb[0].mxu0 %v482
    %v484 = vpop.f32.mrb[0].mxu0
    %v485 = vadd.f32 %v413, %v484
    %v486 = vpop.f32.mrb[0].mxu0
    %487 = vdwg.mxu0
    %v488 = vld [vmem:[#allocation2] sm:$0x1]
    %v489 = vadd.f32 %v488, %v485
    %vm490 = vcmask 8192
    %491 = vst.msk [vmem:[#allocation2] sm:$0x1] %vm490, %v489
    // Predicated region
    $region18: #{tpu_custom_call.1} parent=1 // pred_check
      %p492 = pneg %p24
    $region19: #{tpu_custom_call.1} parent=1 // pred_check_branch
      %494 = sbr.rel (%p492) target = $region21
    $region20: #{tpu_custom_call.1} parent=1 // pred_region
      %v495 = vld [vmem:[#allocation2] sm:$0x1]
      %496 = vst.msk [vmem:[#allocation6] sm:$0x1] %vm490, %v495
    $region21: #{tpu_custom_call.1} parent=1 // pred_fallthru
      _
    // Predicated region
    $region22: #{tpu_custom_call.1} parent=1 // pred_check
      _
    $region23: #{tpu_custom_call.1} parent=1 // pred_check_branch
      %498 = sbr.rel (0) target = $region25
    $region24: #{tpu_custom_call.1} parent=1 // pred_region
      %s500 = ssub.s32 16, 16
      %501 = vsyncadd [#allocation5], %s500
      %s503 = sshll.u32 [#allocation6], 4
      %s504 = int_to_ptr.vmem [resolvable:$true] %s503
      %506 = dma.vmem_to_hbm [thread:$0]  %s504, 16, %s2, [#allocation5]
    $region25: #{tpu_custom_call.1} parent=1 // pred_fallthru
      _
    // Predicated region
    $region26: #{tpu_custom_call.1} parent=1 // pred_check
      _
    $region27: #{tpu_custom_call.1} parent=1 // pred_check_branch
      %508 = sbr.rel (0) target = $region29
    $region28: #{tpu_custom_call.1} parent=1 // pred_region
      %509 = dma.done [#allocation5], 16
    $region29: #{tpu_custom_call.1} parent=1 // pred_fallthru
      _
    %510 = vsyncpa [#allocation4], 1
    %511 = vsyncpa [#allocation5], 1

</llo_original>
